<compile_context>
chip_gen: v5e
topology: v5e:2x2
jax: 0.10.0
libtpu: 0.0.40
codegen_flags: <defaults>
</compile_context>

<pallas_src>
import math

import numpy as np
import jax
import jax.numpy as jnp
from jax.experimental import pallas as pl
from jax.experimental.pallas import tpu as pltpu

FILTER_SIZE = 5
STRIDE = 2
PADDING = (FILTER_SIZE - 2) // 2          # = 1
KSIZE = FILTER_SIZE - 2                   # np.hanning(5)[1:-1] has 3 taps -> 3x3 filter


def _hanning_taps() -> np.ndarray:
    """Normalized 1-D taps; the PyTorch 3x3 filter is their outer product."""
    a = np.hanning(FILTER_SIZE)[1:-1]          # [0.5, 1.0, 0.5]
    return (a / a.sum()).astype(np.float64)    # [0.25, 0.5, 0.25]


def _out_size(size_in: int) -> int:
    return (size_in + 2 * PADDING - KSIZE) // STRIDE + 1


def _conv_matrix(size_in: int, size_out: int) -> np.ndarray:
    """(size_out, size_in) matrix: 3-tap Hanning conv, stride 2, zero pad 1."""
    taps = _hanning_taps()
    m = np.zeros((size_out, size_in), dtype=np.float64)
    for i in range(size_out):
        for k in range(KSIZE):
            r = STRIDE * i + k - PADDING
            if 0 <= r < size_in:              # out-of-range taps hit the zero padding
                m[i, r] = taps[k]
    return m


def _l2pool_kernel(b_ref, mask_ref, x_ref, o_ref):
    # b_ref:    (W, Wout)          constant W-direction conv matrix (taps+stride+pad)
    # mask_ref: (block_rows, 1)    0.0 at the first output row of every plane, else 1.0
    # x_ref:    (block_c * H, W)   block of merged channel-plane rows (lane dim = W)
    # o_ref:    (block_c * Hout, Wout)
    m = o_ref.shape[0]                      # block_c * Hout (merged output rows)
    w = x_ref.shape[1]

    # --- H-direction conv (stride 2, zero pad 1) on the VPU -------------------------
    # output row m uses input rows 2m-1, 2m, 2m+1 with taps 0.25, 0.5, 0.25
    center = x_ref[pl.ds(0, m, 2), :].astype(jnp.float32)     # rows 2m     (tap 0.5)
    odd = x_ref[pl.ds(1, m, 2), :].astype(jnp.float32)        # rows 2m + 1 (tap 0.25)
    c_sq = center * center                                    # square once per element
    d_sq = odd * odd
    # rows 2m - 1 (tap 0.25) = previous odd row; masked to zero at the first output
    # row of every plane, which reproduces the conv's zero padding at the top edge.
    up = jnp.concatenate([jnp.zeros((1, w), jnp.float32), d_sq[:-1, :]], axis=0)
    up = up * mask_ref[...]
    s = 0.5 * c_sq + 0.25 * (d_sq + up)                       # (m, W)

    # --- W-direction conv: ONE lane-dense MXU matmul for the whole block ------------
    y = jnp.dot(s, b_ref[...], preferred_element_type=jnp.float32)   # (m, Wout)
    o_ref[...] = jnp.sqrt(y + 1e-12).astype(o_ref.dtype)


def l2pooling(x: jnp.ndarray, *, block_channels=None) -> jnp.ndarray:
    """x: (N, C, H, W) float -> (N, C, Hout, Wout), same dtype (f32 accumulation)."""
    n, c, h, w = x.shape
    hout, wout = _out_size(h), _out_size(w)
    nc = n * c
    orig_dtype = x.dtype

    # Compute path is f32 (matches the f32 PyTorch filter; also keeps the stride-2
    # sublane loads on plainly-laid-out 32-bit data).
    xf = x.astype(jnp.float32)
    h_pad = h + (h % 2)
    if h_pad != h:
        # One zero row at the bottom is exactly the conv's own zero padding there.
        xf = jnp.pad(xf, ((0, 0), (0, 0), (0, 1), (0, 0)))
    assert hout == h_pad // 2

    b_mat = jnp.asarray(_conv_matrix(w, wout).T, dtype=jnp.float32)   # (W, Wout)

    # ---- block sizing: ~2 MiB of f32 input per grid step, >= ~4 steps, even steps ----
    bytes_per_plane = h_pad * w * 4
    target_block_bytes = 2 * 1024 * 1024
    if block_channels is None:
        steps = max(1, int(round(nc * bytes_per_plane / target_block_bytes)))
        steps = max(steps, min(nc, 4))          # enough steps to pipeline when possible
        steps = min(steps, nc)
        if steps > 1 and steps % 2 == 1:        # even split across v7x's two TensorCores
            steps = min(steps + 1, nc)
        block_c = -(-nc // steps)
    else:
        block_c = max(1, min(int(block_channels), nc))
    # Sublane tiling rule: block row counts (block_c*h_pad and block_c*hout) must be
    # multiples of 8 unless the block spans the whole (merged) array.
    need = 8 // math.gcd(hout, 8)
    block_c = ((block_c + need - 1) // need) * need
    if block_c > nc:
        block_c = nc
    grid_len = pl.cdiv(nc, block_c)

    m_blk = block_c * hout
    mask = jnp.asarray(
        (np.arange(m_blk) % hout != 0).astype(np.float32).reshape(m_blk, 1))

    x_flat = xf.reshape(nc * h_pad, w)      # free reshape: W stays on the lane dim

    out_itemsize = int(np.dtype(orig_dtype).itemsize)
    flops = int(nc * (h_pad * w            # squaring
                      + 5 * hout * w       # H-direction taps on the VPU
                      + 2 * hout * w * wout  # dense W-direction matmul as executed
                      + hout * wout))      # + eps
    bytes_accessed = int(nc * h_pad * w * 4
                         + nc * hout * wout * out_itemsize
                         + b_mat.size * 4 + mask.size * 4)
    cost = pl.CostEstimate(flops=flops,
                           transcendentals=int(nc * hout * wout),
                           bytes_accessed=bytes_accessed)

    out_flat = pl.pallas_call(
        _l2pool_kernel,
        out_shape=jax.ShapeDtypeStruct((nc * hout, wout), orig_dtype),
        grid=(grid_len,),
        in_specs=[
            pl.BlockSpec((w, wout), lambda i: (0, 0)),                 # B: constant
            pl.BlockSpec((m_blk, 1), lambda i: (0, 0)),                # mask: constant
            pl.BlockSpec((block_c * h_pad, w), lambda i: (i, 0)),      # input plane rows
        ],
        out_specs=pl.BlockSpec((m_blk, wout), lambda i: (i, 0)),
        compiler_params=pltpu.CompilerParams(
            dimension_semantics=("parallel",),                         # megacore on v7x
        ),
        cost_estimate=cost,
    )(b_mat, mask, x_flat)

    return out_flat.reshape(n, c, hout, wout)


def _reference_np(x_np: np.ndarray) -> np.ndarray:
    """Ground-truth L2pooling in float64 (direct 3x3 depthwise conv of x**2)."""
    n, c, h, w = x_np.shape
    taps = _hanning_taps()
    g = np.outer(taps, taps)                                    # normalized 3x3 filter
    hout, wout = _out_size(h), _out_size(w)
    xsq = x_np.astype(np.float64) ** 2
    xpad = np.pad(xsq, ((0, 0), (0, 0), (PADDING, PADDING), (PADDING, PADDING)))
    out = np.zeros((n, c, hout, wout), dtype=np.float64)
    for ki in range(KSIZE):
        for kj in range(KSIZE):
            out += g[ki, kj] * xpad[:, :, ki:ki + 2 * hout:2, kj:kj + 2 * wout:2]
    return np.sqrt(out + 1e-12)


if __name__ == "__main__":
    key = jax.random.PRNGKey(0)
    x = jax.random.normal(key, (2, 4, 16, 16), dtype=jnp.float32)    # NCHW

    ref = _reference_np(np.asarray(x))

    # Default block sizing (here: 4 grid steps of 2 planes -> pipelined path).
    out = jax.block_until_ready(l2pooling(x))
    assert out.shape == (2, 4, 8, 8), out.shape
    assert out.dtype == jnp.float32
    np.testing.assert_allclose(np.asarray(out), ref, rtol=1e-5, atol=5e-5)

    # Non-divisible block size -> exercises the masked tail-block writeback path.
    out_tail = jax.block_until_ready(l2pooling(x, block_channels=3))
    np.testing.assert_allclose(np.asarray(out_tail), ref, rtol=1e-5, atol=5e-5)

    # Odd spatial dims (H padded by one zero row inside the wrapper; odd W handled by B).
    x2 = jax.random.normal(jax.random.PRNGKey(1), (1, 3, 15, 17), dtype=jnp.float32)
    ref2 = _reference_np(np.asarray(x2))
    out2 = jax.block_until_ready(l2pooling(x2))
    assert out2.shape == (1, 3, 8, 9), out2.shape
    np.testing.assert_allclose(np.asarray(out2), ref2, rtol=1e-5, atol=5e-5)

    print("KERNEL_OK")
</pallas_src>

<mosaic_0001>
module attributes {stable_mosaic.version = 11 : i64} {
  func.func @_l2pool_kernel(%arg0: i32, %arg1: memref<16x8xf32, #tpu.memory_space<vmem>>, %arg2: memref<16x1xf32, #tpu.memory_space<vmem>>, %arg3: memref<32x16xf32, #tpu.memory_space<vmem>>, %arg4: memref<16x8xf32, #tpu.memory_space<vmem>>) attributes {dimension_semantics = [#tpu.dimension_semantics<parallel>], iteration_bounds = array<i64: 4>, scalar_prefetch = 0 : i64, scratch_operands = 0 : i64, tpu.core_type = #tpu.core_type<tc>, window_params = [{pipeline_mode = #tpu.pipeline_mode<synchronous>, transform_indices = @transform_0, window_bounds = array<i64: 16, 8>}, {pipeline_mode = #tpu.pipeline_mode<synchronous>, transform_indices = @transform_1, window_bounds = array<i64: 16, 1>}, {transform_indices = @transform_2, window_bounds = array<i64: 32, 16>}, {transform_indices = @transform_3, window_bounds = array<i64: 16, 8>}]} {
    %c0 = arith.constant 0 : index
    %c0_0 = arith.constant 0 : index
    %0 = tpu.strided_load %arg3[%c0, %c0_0] {strides = array<i32: 2, 1>} : memref<32x16xf32, #tpu.memory_space<vmem>>, vector<16x16xf32>
    %c1 = arith.constant 1 : index
    %c0_1 = arith.constant 0 : index
    %1 = tpu.strided_load %arg3[%c1, %c0_1] {strides = array<i32: 2, 1>} : memref<32x16xf32, #tpu.memory_space<vmem>>, vector<16x16xf32>
    %2 = arith.mulf %0, %0 : vector<16x16xf32>
    %3 = arith.mulf %1, %1 : vector<16x16xf32>
    %cst = arith.constant 0.000000e+00 : f32
    %4 = vector.broadcast %cst : f32 to vector<1x16xf32>
    %5 = vector.extract_strided_slice %3 {offsets = [0, 0], sizes = [15, 16], strides = [1, 1]} : vector<16x16xf32> to vector<15x16xf32>
    %6 = tpu.concatenate %4, %5 in 0 : vector<1x16xf32>, vector<15x16xf32> -> vector<16x16xf32>
    %c0_2 = arith.constant 0 : index
    %c0_3 = arith.constant 0 : index
    %7 = vector.load %arg2[%c0_2, %c0_3] : memref<16x1xf32, #tpu.memory_space<vmem>>, vector<16x1xf32>
    %8 = vector.broadcast %7 : vector<16x1xf32> to vector<16x16xf32>
    %9 = arith.mulf %6, %8 : vector<16x16xf32>
    %cst_4 = arith.constant 5.000000e-01 : f32
    %10 = vector.broadcast %cst_4 : f32 to vector<16x16xf32>
    %11 = arith.mulf %10, %2 : vector<16x16xf32>
    %12 = arith.addf %3, %9 : vector<16x16xf32>
    %cst_5 = arith.constant 2.500000e-01 : f32
    %13 = vector.broadcast %cst_5 : f32 to vector<16x16xf32>
    %14 = arith.mulf %13, %12 : vector<16x16xf32>
    %15 = arith.addf %11, %14 : vector<16x16xf32>
    %c0_6 = arith.constant 0 : index
    %c0_7 = arith.constant 0 : index
    %16 = vector.load %arg1[%c0_6, %c0_7] : memref<16x8xf32, #tpu.memory_space<vmem>>, vector<16x8xf32>
    %cst_8 = arith.constant dense<0.000000e+00> : vector<16x8xf32>
    %17 = tpu.matmul %15, %16, %cst_8 {dimension_numbers = #tpu.dot_dimension_numbers<[1], [0], [0], [1], [0, 0, 1, 1], [], []>} : vector<16x16xf32>, vector<16x8xf32>, vector<16x8xf32> -> vector<16x8xf32>
    %cst_9 = arith.constant 9.99999996E-13 : f32
    %18 = vector.broadcast %cst_9 : f32 to vector<16x8xf32>
    %19 = arith.addf %17, %18 : vector<16x8xf32>
    %20 = math.sqrt %19 : vector<16x8xf32>
    %c0_10 = arith.constant 0 : index
    %c0_11 = arith.constant 0 : index
    %21 = vector.load %arg4[%c0_10, %c0_11] : memref<16x8xf32, #tpu.memory_space<vmem>>, vector<16x8xf32>
    tpu.vector_store %arg4[%c0_10, %c0_11], %20 {strides = array<i32>} : memref<16x8xf32, #tpu.memory_space<vmem>>, vector<16x8xf32>,
    return
  }
  func.func @transform_0(%arg0: i32) -> (i32, i32) {
    %c0_i32 = arith.constant 0 : i32
    %c0_i32_0 = arith.constant 0 : i32
    %c0_i32_1 = arith.constant 0 : i32
    return %c0_i32, %c0_i32_0 : i32, i32
  }
  func.func @transform_1(%arg0: i32) -> (i32, i32) {
    %c0_i32 = arith.constant 0 : i32
    %c0_i32_0 = arith.constant 0 : i32
    %c0_i32_1 = arith.constant 0 : i32
    return %c0_i32, %c0_i32_0 : i32, i32
  }
  func.func @transform_2(%arg0: i32) -> (i32, i32) {
    %c0_i32 = arith.constant 0 : i32
    %c0_i32_0 = arith.constant 0 : i32
    return %arg0, %c0_i32 : i32, i32
  }
  func.func @transform_3(%arg0: i32) -> (i32, i32) {
    %c0_i32 = arith.constant 0 : i32
    %c0_i32_0 = arith.constant 0 : i32
    return %arg0, %c0_i32 : i32, i32
  }
}

</mosaic_0001>

<llo_original>
// kernel: tpu_custom_call.1
$region0: #{tpu_custom_call.1}
  #allocation0 [shape = 'u32[]', space=smem, size = 0x4, offset = 0x4, fixed_abs, tag = 'smem constant byte address 0x4 - core index']
  #allocation1 [shape = 'u32[72,128]{1,0:T(1,128)}', space=vmem, size = 0x9000, scoped, tag = 'internal scratch']
  %s0 = inlined_call_operand.vmem [shape: f32[16,8], index: 0, kind: input, shape index: {}]
  %s1 = inlined_call_operand.vmem [shape: f32[16,1], index: 1, kind: input, shape index: {}]
  %s2 = inlined_call_operand.vmem [shape: f32[128,16], index: 2, kind: input, shape index: {}]
  %s3 = inlined_call_operand.vmem [shape: f32[64,8], index: 3, kind: output, shape index: {}]
  %s4 = sld [smem:[#allocation0]]
  $region45: #{tpu_custom_call.1} parent=0
    _
  %s6 = ssub.s32 1, %s4
  %s7 = scalar_select 0, %s6, %s4
  loop: start=0, step=1, limit=6
  $region2: #{tpu_custom_call.1} parent=0 // loop_pre_header
    _
  $region3: #{tpu_custom_call.1} parent=0 // loop_header
    %s9 = sphi 0, %s13
    %p10 = scmp.ge.s32.totalorder %s9, 6
    %s17 = sphi 0, %s17
    %s19 = sphi 0, %s17
    %s20 = sphi 0, %s19
    %s34 = sphi 0, %s20
    %s38 = sphi 0, %s38
    %s40 = sphi 0, %s38
    %s41 = sphi 0, %s40
    %s55 = sphi 0, %s41
    %s61 = sphi 0, %s63
    %s64 = sphi 0, %s61
    %s65 = sphi 0, %s64
    %s81 = sphi 0, %s65
    %s87 = sphi 0, %s89
    %s90 = sphi 0, %s87
    %s91 = sphi 0, %s90
    %s107 = sphi 0, %s91
  $region4: #{tpu_custom_call.1} parent=0 // loop_header_branch
    %12 = sbr.rel (%p10) target = $region8
  $region5: #{tpu_custom_call.1} parent=0 // loop_body
    %s14 = ssub.s32 %s9, 1
    %s15 = ssub.s32 %s9, 2
    %s16 = sadd.s32 %s9, 1
    %s18 = sadd.s32 %s17, 1
    %p21 = scmp.eq.s32.totalorder %s9, 3
    %p22 = scmp.ne.s32.totalorder %s17, %s19
    %p23 = scmp.eq.s32.totalorder %s9, 0
    %p24 = por %p22, %p23
    %p25 = scmp.ne.s32.totalorder %s17, %s19
    %p26 = scmp.eq.s32.totalorder %s14, 3
    %p27 = por %p25, %p26
    %p28 = scmp.ne.s32.totalorder %s19, %s20
    %p29 = scmp.eq.s32.totalorder %s14, 0
    %p30 = por %p28, %p29
    %p31 = scmp.ne.s32.totalorder %s19, %s20
    %p32 = scmp.eq.s32.totalorder %s15, 3
    %p33 = por %p31, %p32
    %p35 = scmp.ne.s32.totalorder %s20, %s34
    %p36 = scmp.eq.s32.totalorder %s15, 0
    %p37 = por %p35, %p36
    %s39 = sadd.s32 %s38, 1
    %p42 = scmp.eq.s32.totalorder %s9, 3
    %p43 = scmp.ne.s32.totalorder %s38, %s40
    %p44 = scmp.eq.s32.totalorder %s9, 0
    %p45 = por %p43, %p44
    %p46 = scmp.ne.s32.totalorder %s38, %s40
    %p47 = scmp.eq.s32.totalorder %s14, 3
    %p48 = por %p46, %p47
    %p49 = scmp.ne.s32.totalorder %s40, %s41
    %p50 = scmp.eq.s32.totalorder %s14, 0
    %p51 = por %p49, %p50
    %p52 = scmp.ne.s32.totalorder %s40, %s41
    %p53 = scmp.eq.s32.totalorder %s15, 3
    %p54 = por %p52, %p53
    %p56 = scmp.ne.s32.totalorder %s41, %s55
    %p57 = scmp.eq.s32.totalorder %s15, 0
    %p58 = por %p56, %p57
    %s59 = ssub.s32 %s9, %s16
    %p60 = scmp.eq.s32.totalorder %s59, 0
    %s62 = sadd.s32 %s61, 1
    %s63 = scalar_select %p60, %s61, %s62
    %p66 = pneg %p60
    %p67 = scmp.eq.s32.totalorder %s9, 3
    %p68 = por %p66, %p67
    %p69 = scmp.ne.s32.totalorder %s61, %s64
    %p70 = scmp.eq.s32.totalorder %s9, 0
    %p71 = por %p69, %p70
    %p72 = scmp.ne.s32.totalorder %s61, %s64
    %p73 = scmp.eq.s32.totalorder %s14, 3
    %p74 = por %p72, %p73
    %p75 = scmp.ne.s32.totalorder %s64, %s65
    %p76 = scmp.eq.s32.totalorder %s14, 0
    %p77 = por %p75, %p76
    %p78 = scmp.ne.s32.totalorder %s64, %s65
    %p79 = scmp.eq.s32.totalorder %s15, 3
    %p80 = por %p78, %p79
    %p82 = scmp.ne.s32.totalorder %s65, %s81
    %p83 = scmp.eq.s32.totalorder %s15, 0
    %p84 = por %p82, %p83
    %s85 = ssub.s32 %s9, %s16
    %p86 = scmp.eq.s32.totalorder %s85, 0
    %s88 = sadd.s32 %s87, 1
    %s89 = scalar_select %p86, %s87, %s88
    %p92 = pneg %p86
    %p93 = scmp.eq.s32.totalorder %s9, 3
    %p94 = por %p92, %p93
    %p95 = scmp.ne.s32.totalorder %s87, %s90
    %p96 = scmp.eq.s32.totalorder %s9, 0
    %p97 = por %p95, %p96
    %p98 = scmp.ne.s32.totalorder %s87, %s90
    %p99 = scmp.eq.s32.totalorder %s14, 3
    %p100 = por %p98, %p99
    %p101 = scmp.ne.s32.totalorder %s90, %s91
    %p102 = scmp.eq.s32.totalorder %s14, 0
    %p103 = por %p101, %p102
    %p104 = scmp.ne.s32.totalorder %s90, %s91
    %p105 = scmp.eq.s32.totalorder %s15, 3
    %p106 = por %p104, %p105
    %p108 = scmp.ne.s32.totalorder %s91, %s107
    %p109 = scmp.eq.s32.totalorder %s15, 0
    %p110 = por %p108, %p109
    %p111 = scmp.le.s32.totalorder 1, %s9
    %p112 = scmp.lt.s32.totalorder %s9, 5
    %p113 = pnand %p111, %p112
    %p114 = pneg %p113
    // Predicated region
    $region9: #{tpu_custom_call.1} parent=5 // pred_check
      _
    $region10: #{tpu_custom_call.1} parent=5 // pred_check_branch
      %116 = sbr.rel (%p113) target = $region12
    $region11: #{tpu_custom_call.1} parent=5 // pred_region
      %s117 = ssub.s32 %s9, 1
      // Predicated region
      $region13: #{tpu_custom_call.1} parent=11 // pred_check
        %p118 = pneg %p30
      $region14: #{tpu_custom_call.1} parent=11 // pred_check_branch
        %120 = sbr.rel (%p118) target = $region16
      $region15: #{tpu_custom_call.1} parent=11 // pred_region
        _
      $region16: #{tpu_custom_call.1} parent=11 // pred_fallthru
        _
      // Predicated region
      $region17: #{tpu_custom_call.1} parent=11 // pred_check
        %p121 = pneg %p51
      $region18: #{tpu_custom_call.1} parent=11 // pred_check_branch
        %123 = sbr.rel (%p121) target = $region20
      $region19: #{tpu_custom_call.1} parent=11 // pred_region
        _
      $region20: #{tpu_custom_call.1} parent=11 // pred_fallthru
        _
    $region12: #{tpu_custom_call.1} parent=5 // pred_fallthru
      _
    %p124 = scmp.lt.s32.totalorder %s9, 4
    // Predicated region
    $region21: #{tpu_custom_call.1} parent=5 // pred_check
      %p125 = pneg %p124
    $region22: #{tpu_custom_call.1} parent=5 // pred_check_branch
      %127 = sbr.rel (%p125) target = $region24
    $region23: #{tpu_custom_call.1} parent=5 // pred_region
      // Predicated region
      $region25: #{tpu_custom_call.1} parent=23 // pred_check
        %p128 = pneg %p71
      $region26: #{tpu_custom_call.1} parent=23 // pred_check_branch
        %130 = sbr.rel (%p128) target = $region28
      $region27: #{tpu_custom_call.1} parent=23 // pred_region
        %s131 = smul.u32 4, %s9
        %p132 = scmp.lt.s32.totalorder %s131, 15
        %s133 = scalar_select %p132, %s131, 15
        %s134 = smul.addr %s133, 8
        %s135 = scalar_lea.vmem %s2, %s134
        %s136 = smul.u32 4, %s9
      $region28: #{tpu_custom_call.1} parent=23 // pred_fallthru
        _
    $region24: #{tpu_custom_call.1} parent=5 // pred_fallthru
      _
    %p137 = scmp.le.s32.totalorder 1, %s9
    %p138 = scmp.lt.s32.totalorder %s9, 5
    %p139 = pnand %p137, %p138
    %p140 = pneg %p139
    // Predicated region
    $region29: #{tpu_custom_call.1} parent=5 // pred_check
      _
    $region30: #{tpu_custom_call.1} parent=5 // pred_check_branch
      %142 = sbr.rel (%p139) target = $region32
    $region31: #{tpu_custom_call.1} parent=5 // pred_region
      %s143 = ssub.s32 %s9, 1
      %p144 = pneg %p30
      %p145 = pneg %p27
      %p146 = pneg %p51
      %p147 = pneg %p48
      %s148 = smul.u32 4, %s14
      %p149 = scmp.lt.s32.totalorder %s148, 15
      %s150 = scalar_select %p149, %s148, 15
      %s151 = smul.addr %s150, 8
      %s152 = scalar_lea.vmem %s2, %s151
      %p153 = pneg %p77
      %p154 = pneg %p74
      %p155 = pneg %p103
      %p156 = pneg %p100
      %s157 = smul.u32 2, %s14
      %p158 = scmp.lt.s32.totalorder %s157, 7
      %s159 = scalar_select %p158, %s157, 7
      %s160 = smul.addr %s159, 8
      %s161 = scalar_lea.vmem %s3, %s160
      %s162 = smul.u32 4, %s14
      %p163 = scmp.lt.s32.totalorder %s162, 15
      %s164 = scalar_select %p163, %s162, 15
      %s165 = smul.addr %s164, 8
      %s166 = scalar_lea.vmem %s2, %s165
      %s167 = smul.u32 4, %s14
      %s168 = smul.u32 2, %s14
      %p169 = scmp.lt.s32.totalorder %s168, 7
      %s170 = scalar_select %p169, %s168, 7
      %s171 = smul.addr %s170, 8
      %s172 = scalar_lea.vmem %s3, %s171
      %s173 = smul.u32 2, %s14
      %v174 = vld [vmem:[%s166] ss:$2 sm:$0xff]
      %s175 = scalar_lea.vmem %s166, 16
      %v176 = vld [vmem:[%s175] ss:$2 sm:$0xff]
      %s177 = scalar_lea.vmem %s166, 1
      %v178 = vld [vmem:[%s177] ss:$2 sm:$0xff]
      %s179 = scalar_lea.vmem %s166, 17
      %v180 = vld [vmem:[%s179] ss:$2 sm:$0xff]
      %v181 = vmul.f32 %v174, %v174
      %v182 = vmul.f32 %v176, %v176
      %v183 = vmul.f32 %v178, %v178
      %v184 = vmul.f32 %v180, %v180
      %vm187 = vcmask 1040384
      %v188 = vrot.slane %v183, 7
      %v189 = vrot.slane %v184, 7
      %v190 = vsel %vm187, %v188, %v189
      %v193 = vsel %vm187, 0.0, %v188
      %v194 = vld [vmem:[%s1] sm:$0xff]
      %v195 = vld [vmem:[%s1 + $0x8] sm:$0xff]
      %197 = vset.pattern.permute.xlu0 0
      %198 = vperm.xlu0 %197, %v194
      %v199 = vpop.permute.xlu0 %198
      %202 = vset.pattern.permute.xlu0 0
      %203 = vperm.xlu0 %202, %v195
      %v204 = vpop.permute.xlu0 %203
      %v206 = vmul.f32 %v193, %v199
      %v207 = vmul.f32 %v190, %v204
      %v208 = vmul.f32 %v181, 0.5
      %v209 = vmul.f32 %v182, 0.5
      %v210 = vadd.f32 %v183, %v206
      %v211 = vadd.f32 %v184, %v207
      %v212 = vmul.f32 %v210, 0.25
      %v213 = vmul.f32 %v211, 0.25
      %v214 = vadd.f32 %v208, %v212
      %v215 = vadd.f32 %v209, %v213
      %v216 = vld [vmem:[%s0] sm:$0xff]
      %v217 = vld [vmem:[%s0 + $0x8] sm:$0xff]
      %vm218 = vcmask 130048
      %v220 = vsel %vm218, %v214, 0
      %v223 = vsel %vm218, %v215, 0
      %225 = vmatpush.msra.mxu0 0.0
      %226 = vmatpush.msra.mxu0 0.0
      %227 = vmatpush.msra.mxu0 0.0
      %228 = vmatpush.msra.mxu0 0.0
      %229 = vmatpush.msra.mxu0 0.0
      %230 = vmatpush.msra.mxu0 0.0
      %231 = vmatpush.msra.mxu0 0.0
      %232 = vmatpush.msra.mxu0 0.0
      %233 = vmatpush.msra.mxu0 0.0
      %234 = vmatpush.msra.mxu0 0.0
      %235 = vmatpush.msra.mxu0 0.0
      %236 = vmatpush.msra.mxu0 0.0
      %237 = vmatpush.msra.mxu0 0.0
      %238 = vmatpush.msra.mxu0 0.0
      %239 = vmatpush.msra.mxu0 %v217
      %240 = vmatpush.msra.mxu0 %v216
      %241 = vmatmul.f32.gmra.mxu0 %v220
      %v242 = vpop.f32.mrf.mxu0
      %v243 = vadd.f32 1e-12, %v242
      %244 = vmatmul.f32.gmra.mxu0 %v223
      %v245 = vpop.f32.mrf.mxu0
      %v246 = vadd.f32 1e-12, %v245
      %247 = vdwg.mxu0
      %v248 = vrsqrt.pop %v243
      %v249 = vmul.f32 %v248, %v243
      %v250 = vmul.f32 %v249, %v248
      %v251 = vmul.f32 0.5, %v250
      %v252 = vsub.f32 1.5, %v251
      %v253 = vmul.f32 %v248, %v252
      %v254 = vmul.f32 %v243, %v253
      %vm255 = vcmp.eq.f32.partialorder %v243, inf
      %v256 = vsel %vm255, %v243, %v254
      %vm257 = vcmp.eq.f32.partialorder %v243, 0.0
      %v258 = vand.u32 %v243, 2147483648
      %v259 = vsel %vm257, %v258, %v256
      %v260 = vrsqrt.pop %v246
      %v261 = vmul.f32 %v260, %v246
      %v262 = vmul.f32 %v261, %v260
      %v263 = vmul.f32 0.5, %v262
      %v264 = vsub.f32 1.5, %v263
      %v265 = vmul.f32 %v260, %v264
      %v266 = vmul.f32 %v246, %v265
      %vm267 = vcmp.eq.f32.partialorder %v246, inf
      %v268 = vsel %vm267, %v246, %v266
      %vm269 = vcmp.eq.f32.partialorder %v246, 0.0
      %v270 = vand.u32 %v246, 2147483648
      %v271 = vsel %vm269, %v270, %v268
      %vm272 = vcmask 64512
      %273 = vst.msk [vmem:[%s172] sm:$0xff] %vm272, %v259
      %274 = vst.msk [vmem:[%s172 + $0x8] sm:$0xff] %vm272, %v271
      %s275 = smul.u32 2, %s14
      %p276 = scmp.lt.s32.totalorder %s275, 7
      %s277 = scalar_select %p276, %s275, 7
      %s278 = smul.addr %s277, 8
      %s279 = scalar_lea.vmem %s3, %s278
      // Predicated region
      $region33: #{tpu_custom_call.1} parent=31 // pred_check
        %p280 = pneg %p100
      $region34: #{tpu_custom_call.1} parent=31 // pred_check_branch
        %282 = sbr.rel (%p280) target = $region36
      $region35: #{tpu_custom_call.1} parent=31 // pred_region
        %s283 = smul.u32 2, %s14
      $region36: #{tpu_custom_call.1} parent=31 // pred_fallthru
        _
    $region32: #{tpu_custom_call.1} parent=5 // pred_fallthru
      _
    %p284 = scmp.le.s32.totalorder 2, %s9
    // Predicated region
    $region37: #{tpu_custom_call.1} parent=5 // pred_check
      %p285 = pneg %p284
    $region38: #{tpu_custom_call.1} parent=5 // pred_check_branch
      %287 = sbr.rel (%p285) target = $region40
    $region39: #{tpu_custom_call.1} parent=5 // pred_region
      %s288 = ssub.s32 %s9, 2
      // Predicated region
      $region41: #{tpu_custom_call.1} parent=39 // pred_check
        %p289 = pneg %p106
      $region42: #{tpu_custom_call.1} parent=39 // pred_check_branch
        %291 = sbr.rel (%p289) target = $region44
      $region43: #{tpu_custom_call.1} parent=39 // pred_region
        %s292 = smul.u32 2, %s15
        %p293 = scmp.lt.s32.totalorder %s292, 7
        %s294 = scalar_select %p293, %s292, 7
        %s295 = smul.addr %s294, 8
        %s296 = scalar_lea.vmem %s3, %s295
      $region44: #{tpu_custom_call.1} parent=39 // pred_fallthru
        _
    $region40: #{tpu_custom_call.1} parent=5 // pred_fallthru
      _
  $region6: #{tpu_custom_call.1} parent=0 // loop_footer
    %s13 = sadd.s32 1, %s9
  $region7: #{tpu_custom_call.1} parent=0 // loop_footer_branch
    %8 = sbr.rel target = $region3
  $region8: #{tpu_custom_call.1} parent=0 // loop_exit
    _

</llo_original>
